<compile_context>
chip_gen: v7x
topology: tpu7x:2x2x1
jax: 0.10.0
libtpu: 0.0.40
codegen_flags: <defaults>
</compile_context>

<pallas_src>
import functools

import jax
import jax.numpy as jnp
from jax.experimental import pallas as pl
from jax.experimental.pallas import tpu as pltpu


def _fused_mlp_bn_kernel(x_ref, w1_ref, b1_ref, w2_ref, gamma_ref, beta_ref,
                         o_ref,
                         sum_ref, ssq_ref, scale_ref, shift_ref,
                         *, n_rows, eps):
    """Fused fc1 -> GELU -> fc2 -> BatchNorm1d(training) over a 2-phase grid."""
    phase = pl.program_id(0)
    i = pl.program_id(1)
    n_tiles = pl.num_programs(1)

    # fc1 -> GELU -> fc2.  bf16 operands on the MXU, f32 accumulation,
    # all elementwise math in f32.
    h = jnp.dot(x_ref[...], w1_ref[...], preferred_element_type=jnp.float32)
    h = jax.nn.gelu(h + b1_ref[...], approximate=True)       # act() == GELU
    y = jnp.dot(h.astype(w2_ref.dtype), w2_ref[...],
                preferred_element_type=jnp.float32)

    @pl.when(phase == 0)
    def _stats_phase():
        @pl.when(i == 0)
        def _init():
            sum_ref[...] = jnp.zeros_like(sum_ref)
            ssq_ref[...] = jnp.zeros_like(ssq_ref)

        # NOTE: E[y^2]-E[y]^2 in f32 is fine at these sizes; switch to a
        # compensated/Welford combine if M grows very large.
        sum_ref[...] += jnp.sum(y, axis=0, keepdims=True)
        ssq_ref[...] += jnp.sum(y * y, axis=0, keepdims=True)
        # Keep the output block well-defined in phase 0 (overwritten in phase 1).
        o_ref[...] = y.astype(o_ref.dtype)

        @pl.when(i == n_tiles - 1)
        def _finalize_stats():
            mean = sum_ref[...] / n_rows
            var = ssq_ref[...] / n_rows - mean * mean          # biased variance
            inv_std = jax.lax.rsqrt(var + eps)
            scale = gamma_ref[...] * inv_std
            scale_ref[...] = scale
            shift_ref[...] = beta_ref[...] - mean * scale

    @pl.when(phase == 1)
    def _apply_phase():
        o_ref[...] = (y * scale_ref[...] + shift_ref[...]).astype(o_ref.dtype)


def mlp_forward(x, params, *, row_tile=None, eps=1e-5,
                matmul_dtype=jnp.bfloat16):
    B, N, C = x.shape
    M = B * N
    if row_tile is None:
        # Biggest tile that comfortably fits VMEM at these channel counts;
        # large tiles amortize the ~600-cycle per-grid-step overhead.
        row_tile = M if M <= 1024 else 1024
    assert M % row_tile == 0, "row count must be divisible by row_tile"
    n_tiles = M // row_tile

    x2 = x.reshape(M, C).astype(matmul_dtype)
    w1 = params["w1"].astype(matmul_dtype)      # (C, H)  == fc1.weight.T
    b1 = params["b1"].astype(jnp.float32)       # (1, H)
    w2 = params["w2"].astype(matmul_dtype)      # (H, C)  == fc2.weight.T (no bias)
    gamma = params["gamma"].astype(jnp.float32)  # (1, C) BN weight (constant `init`)
    beta = params["beta"].astype(jnp.float32)    # (1, C) BN bias
    H = w1.shape[1]

    kernel = functools.partial(_fused_mlp_bn_kernel, n_rows=M, eps=eps)

    # TODO(synk): BN running_mean/running_var (bn_momentum) buffer updates are not
    # modeled; they do not affect the training-mode forward output.
    out2 = pl.pallas_call(
        kernel,
        out_shape=jax.ShapeDtypeStruct((M, C), jnp.float32),
        grid_spec=pltpu.PrefetchScalarGridSpec(
            num_scalar_prefetch=0,
            grid=(2, n_tiles),                       # (phase, row-tile)
            in_specs=[
                pl.BlockSpec((row_tile, C), lambda p, i: (i, 0)),  # x
                pl.BlockSpec((C, H), lambda p, i: (0, 0)),         # w1 (resident)
                pl.BlockSpec((1, H), lambda p, i: (0, 0)),         # b1 (resident)
                pl.BlockSpec((H, C), lambda p, i: (0, 0)),         # w2 (resident)
                pl.BlockSpec((1, C), lambda p, i: (0, 0)),         # gamma
                pl.BlockSpec((1, C), lambda p, i: (0, 0)),         # beta
            ],
            out_specs=pl.BlockSpec((row_tile, C), lambda p, i: (i, 0)),
            scratch_shapes=[
                pltpu.VMEM((1, C), jnp.float32),   # sum
                pltpu.VMEM((1, C), jnp.float32),   # sum of squares
                pltpu.VMEM((1, C), jnp.float32),   # BN scale
                pltpu.VMEM((1, C), jnp.float32),   # BN shift
            ],
        ),
        compiler_params=pltpu.CompilerParams(
            # phase axis is inherently sequential (stats before apply); the
            # row axis carries the stats accumulator, so both are "arbitrary".
            dimension_semantics=("arbitrary", "arbitrary")),
    )(x2, w1, b1, w2, gamma, beta)

    return out2.reshape(B, N, C)


def mlp_reference(x, params, eps=1e-5, matmul_dtype=jnp.bfloat16):
    """Pure-JAX reference matching the PyTorch forward (training-mode BN),
    mirroring the kernel's dtype policy (bf16 matmul operands, f32 elsewhere)."""
    B, N, C = x.shape
    x2 = x.reshape(B * N, C).astype(matmul_dtype)
    w1 = params["w1"].astype(matmul_dtype)
    w2 = params["w2"].astype(matmul_dtype)
    h = jnp.dot(x2, w1, preferred_element_type=jnp.float32) + params["b1"]
    h = jax.nn.gelu(h, approximate=True)
    y = jnp.dot(h.astype(matmul_dtype), w2, preferred_element_type=jnp.float32)
    mean = y.mean(axis=0, keepdims=True)
    var = ((y - mean) ** 2).mean(axis=0, keepdims=True)
    out = (y - mean) * jax.lax.rsqrt(var + eps) * params["gamma"] + params["beta"]
    return out.reshape(B, N, C)


def init_params(key, in_dim, mlp_ratio, init):
    hid_dim = round(in_dim * mlp_ratio)
    k1, k2, k3 = jax.random.split(key, 3)
    return {
        # Linear(in_dim, hid_dim): weight (hid, in) stored transposed as (in, hid)
        "w1": 0.1 * jax.random.normal(k1, (in_dim, hid_dim), jnp.float32),
        "b1": 0.1 * jax.random.normal(k2, (1, hid_dim), jnp.float32),
        # Linear(hid_dim, in_dim, bias=False): weight (in, hid) stored as (hid, in)
        "w2": 0.1 * jax.random.normal(k3, (hid_dim, in_dim), jnp.float32),
        # BatchNorm1d(in_dim): weight (gamma) = constant `init`, bias (beta) = 0
        "gamma": jnp.full((1, in_dim), init, jnp.float32),
        "beta": jnp.zeros((1, in_dim), jnp.float32),
    }


if __name__ == "__main__":
    # Module config: Mlp(in_dim=16, mlp_ratio=2.0, bn_momentum=0.1, act=GELU, init=0.5)
    in_dim, mlp_ratio, init = 16, 2.0, 0.5
    B, N = 2, 64  # -> (B*N, C) = (128, 16) flattened rows

    key = jax.random.PRNGKey(0)
    kx, kp = jax.random.split(key)
    x = jax.random.normal(kx, (B, N, in_dim), jnp.float32)
    params = init_params(kp, in_dim, mlp_ratio, init)

    out = jax.block_until_ready(mlp_forward(x, params))
    ref = jax.block_until_ready(mlp_reference(x, params))

    assert out.shape == (B, N, in_dim)
    assert jnp.allclose(out, ref, atol=5e-3, rtol=5e-3), "mismatch vs reference"
    print("KERNEL_OK")
</pallas_src>

<mosaic_0001>
module attributes {stable_mosaic.version = 11 : i64} {
  func.func @_fused_mlp_bn_kernel(%arg0: i32, %arg1: i32, %arg2: memref<128x16xbf16, #tpu.memory_space<vmem>>, %arg3: memref<16x32xbf16, #tpu.memory_space<vmem>>, %arg4: memref<1x32xf32, #tpu.memory_space<vmem>>, %arg5: memref<32x16xbf16, #tpu.memory_space<vmem>>, %arg6: memref<1x16xf32, #tpu.memory_space<vmem>>, %arg7: memref<1x16xf32, #tpu.memory_space<vmem>>, %arg8: memref<128x16xf32, #tpu.memory_space<vmem>>, %arg9: memref<1x16xf32, #tpu.memory_space<vmem>>, %arg10: memref<1x16xf32, #tpu.memory_space<vmem>>, %arg11: memref<1x16xf32, #tpu.memory_space<vmem>>, %arg12: memref<1x16xf32, #tpu.memory_space<vmem>>) attributes {dimension_semantics = [#tpu.dimension_semantics<arbitrary>, #tpu.dimension_semantics<arbitrary>], iteration_bounds = array<i64: 2, 1>, scalar_prefetch = 0 : i64, scratch_operands = 4 : i64, tpu.core_type = #tpu.core_type<tc>, window_params = [{transform_indices = @transform_0, window_bounds = array<i64: 128, 16>}, {pipeline_mode = #tpu.pipeline_mode<synchronous>, transform_indices = @transform_1, window_bounds = array<i64: 16, 32>}, {pipeline_mode = #tpu.pipeline_mode<synchronous>, transform_indices = @transform_2, window_bounds = array<i64: 1, 32>}, {pipeline_mode = #tpu.pipeline_mode<synchronous>, transform_indices = @transform_3, window_bounds = array<i64: 32, 16>}, {pipeline_mode = #tpu.pipeline_mode<synchronous>, transform_indices = @transform_4, window_bounds = array<i64: 1, 16>}, {pipeline_mode = #tpu.pipeline_mode<synchronous>, transform_indices = @transform_5, window_bounds = array<i64: 1, 16>}, {transform_indices = @transform_6, window_bounds = array<i64: 128, 16>}]} {
    %c0 = arith.constant 0 : index
    %c0_0 = arith.constant 0 : index
    %0 = vector.load %arg2[%c0, %c0_0] : memref<128x16xbf16, #tpu.memory_space<vmem>>, vector<128x16xbf16>
    %c0_1 = arith.constant 0 : index
    %c0_2 = arith.constant 0 : index
    %1 = vector.load %arg3[%c0_1, %c0_2] : memref<16x32xbf16, #tpu.memory_space<vmem>>, vector<16x32xbf16>
    %cst = arith.constant dense<0.000000e+00> : vector<128x32xf32>
    %2 = tpu.matmul %0, %1, %cst {dimension_numbers = #tpu.dot_dimension_numbers<[1], [0], [0], [1], [0, 0, 1, 1], [], []>} : vector<128x16xbf16>, vector<16x32xbf16>, vector<128x32xf32> -> vector<128x32xf32>
    %c0_3 = arith.constant 0 : index
    %c0_4 = arith.constant 0 : index
    %3 = vector.load %arg4[%c0_3, %c0_4] : memref<1x32xf32, #tpu.memory_space<vmem>>, vector<1x32xf32>
    %4 = vector.broadcast %3 : vector<1x32xf32> to vector<128x32xf32>
    %5 = arith.addf %2, %4 : vector<128x32xf32>
    %6 = arith.mulf %5, %5 : vector<128x32xf32>
    %7 = arith.mulf %5, %6 : vector<128x32xf32>
    %cst_5 = arith.constant 4.471500e-02 : f32
    %8 = vector.broadcast %cst_5 : f32 to vector<128x32xf32>
    %9 = arith.mulf %8, %7 : vector<128x32xf32>
    %10 = arith.addf %5, %9 : vector<128x32xf32>
    %cst_6 = arith.constant 0.797884583 : f32
    %11 = vector.broadcast %cst_6 : f32 to vector<128x32xf32>
    %12 = arith.mulf %11, %10 : vector<128x32xf32>
    %13 = math.tanh %12 : vector<128x32xf32>
    %cst_7 = arith.constant 1.000000e+00 : f32
    %14 = vector.broadcast %cst_7 : f32 to vector<128x32xf32>
    %15 = arith.addf %14, %13 : vector<128x32xf32>
    %cst_8 = arith.constant 5.000000e-01 : f32
    %16 = vector.broadcast %cst_8 : f32 to vector<128x32xf32>
    %17 = arith.mulf %16, %15 : vector<128x32xf32>
    %18 = arith.mulf %5, %17 : vector<128x32xf32>
    %19 = arith.truncf %18 : vector<128x32xf32> to vector<128x32xbf16>
    %c0_9 = arith.constant 0 : index
    %c0_10 = arith.constant 0 : index
    %20 = vector.load %arg5[%c0_9, %c0_10] : memref<32x16xbf16, #tpu.memory_space<vmem>>, vector<32x16xbf16>
    %cst_11 = arith.constant dense<0.000000e+00> : vector<128x16xf32>
    %21 = tpu.matmul %19, %20, %cst_11 {dimension_numbers = #tpu.dot_dimension_numbers<[1], [0], [0], [1], [0, 0, 1, 1], [], []>} : vector<128x32xbf16>, vector<32x16xbf16>, vector<128x16xf32> -> vector<128x16xf32>
    %c0_i32 = arith.constant 0 : i32
    %22 = arith.cmpi eq, %arg0, %c0_i32 : i32
    %23 = arith.extui %22 : i1 to i32
    %c0_i32_12 = arith.constant 0 : i32
    %24 = arith.cmpi ne, %23, %c0_i32_12 : i32
    scf.if %24 {
      %c0_i32_14 = arith.constant 0 : i32
      %28 = arith.cmpi eq, %arg1, %c0_i32_14 : i32
      %29 = arith.extui %28 : i1 to i32
      %c0_i32_15 = arith.constant 0 : i32
      %30 = arith.cmpi ne, %29, %c0_i32_15 : i32
      scf.if %30 {
        %cst_30 = arith.constant 0.000000e+00 : f32
        %46 = vector.broadcast %cst_30 : f32 to vector<1x16xf32>
        %c0_31 = arith.constant 0 : index
        %c0_32 = arith.constant 0 : index
        %47 = vector.load %arg9[%c0_31, %c0_32] : memref<1x16xf32, #tpu.memory_space<vmem>>, vector<1x16xf32>
        tpu.vector_store %arg9[%c0_31, %c0_32], %46 {strides = array<i32>} : memref<1x16xf32, #tpu.memory_space<vmem>>, vector<1x16xf32>,
        %cst_33 = arith.constant 0.000000e+00 : f32
        %48 = vector.broadcast %cst_33 : f32 to vector<1x16xf32>
        %c0_34 = arith.constant 0 : index
        %c0_35 = arith.constant 0 : index
        %49 = vector.load %arg10[%c0_34, %c0_35] : memref<1x16xf32, #tpu.memory_space<vmem>>, vector<1x16xf32>
        tpu.vector_store %arg10[%c0_34, %c0_35], %48 {strides = array<i32>} : memref<1x16xf32, #tpu.memory_space<vmem>>, vector<1x16xf32>,
      } else {
      }
      %c0_16 = arith.constant 0 : index
      %c0_17 = arith.constant 0 : index
      %31 = vector.load %arg9[%c0_16, %c0_17] : memref<1x16xf32, #tpu.memory_space<vmem>>, vector<1x16xf32>
      %cst_18 = arith.constant dense<0.000000e+00> : vector<16xf32>
      %32 = vector.multi_reduction <add>, %21, %cst_18 [0] : vector<128x16xf32> to vector<16xf32>
      %33 = vector.shape_cast %32 : vector<16xf32> to vector<1x16xf32>
      %34 = arith.addf %31, %33 : vector<1x16xf32>
      %c0_19 = arith.constant 0 : index
      %c0_20 = arith.constant 0 : index
      %35 = vector.load %arg9[%c0_19, %c0_20] : memref<1x16xf32, #tpu.memory_space<vmem>>, vector<1x16xf32>
      tpu.vector_store %arg9[%c0_19, %c0_20], %34 {strides = array<i32>} : memref<1x16xf32, #tpu.memory_space<vmem>>, vector<1x16xf32>,
      %c0_21 = arith.constant 0 : index
      %c0_22 = arith.constant 0 : index
      %36 = vector.load %arg10[%c0_21, %c0_22] : memref<1x16xf32, #tpu.memory_space<vmem>>, vector<1x16xf32>
      %37 = arith.mulf %21, %21 : vector<128x16xf32>
      %cst_23 = arith.constant dense<0.000000e+00> : vector<16xf32>
      %38 = vector.multi_reduction <add>, %37, %cst_23 [0] : vector<128x16xf32> to vector<16xf32>
      %39 = vector.shape_cast %38 : vector<16xf32> to vector<1x16xf32>
      %40 = arith.addf %36, %39 : vector<1x16xf32>
      %c0_24 = arith.constant 0 : index
      %c0_25 = arith.constant 0 : index
      %41 = vector.load %arg10[%c0_24, %c0_25] : memref<1x16xf32, #tpu.memory_space<vmem>>, vector<1x16xf32>
      tpu.vector_store %arg10[%c0_24, %c0_25], %40 {strides = array<i32>} : memref<1x16xf32, #tpu.memory_space<vmem>>, vector<1x16xf32>,
      %c0_26 = arith.constant 0 : index
      %c0_27 = arith.constant 0 : index
      %42 = vector.load %arg8[%c0_26, %c0_27] : memref<128x16xf32, #tpu.memory_space<vmem>>, vector<128x16xf32>
      tpu.vector_store %arg8[%c0_26, %c0_27], %21 {strides = array<i32>} : memref<128x16xf32, #tpu.memory_space<vmem>>, vector<128x16xf32>,
      %c0_i32_28 = arith.constant 0 : i32
      %43 = arith.cmpi eq, %arg1, %c0_i32_28 : i32
      %44 = arith.extui %43 : i1 to i32
      %c0_i32_29 = arith.constant 0 : i32
      %45 = arith.cmpi ne, %44, %c0_i32_29 : i32
      scf.if %45 {
        %c0_30 = arith.constant 0 : index
        %c0_31 = arith.constant 0 : index
        %46 = vector.load %arg9[%c0_30, %c0_31] : memref<1x16xf32, #tpu.memory_space<vmem>>, vector<1x16xf32>
        %cst_32 = arith.constant 1.280000e+02 : f32
        %47 = vector.broadcast %cst_32 : f32 to vector<1x16xf32>
        %48 = arith.divf %46, %47 : vector<1x16xf32>
        %c0_33 = arith.constant 0 : index
        %c0_34 = arith.constant 0 : index
        %49 = vector.load %arg10[%c0_33, %c0_34] : memref<1x16xf32, #tpu.memory_space<vmem>>, vector<1x16xf32>
        %cst_35 = arith.constant 1.280000e+02 : f32
        %50 = vector.broadcast %cst_35 : f32 to vector<1x16xf32>
        %51 = arith.divf %49, %50 : vector<1x16xf32>
        %52 = arith.mulf %48, %48 : vector<1x16xf32>
        %53 = arith.subf %51, %52 : vector<1x16xf32>
        %cst_36 = arith.constant 9.99999974E-6 : f32
        %54 = vector.broadcast %cst_36 : f32 to vector<1x16xf32>
        %55 = arith.addf %53, %54 : vector<1x16xf32>
        %56 = math.rsqrt %55 : vector<1x16xf32>
        %c0_37 = arith.constant 0 : index
        %c0_38 = arith.constant 0 : index
        %57 = vector.load %arg6[%c0_37, %c0_38] : memref<1x16xf32, #tpu.memory_space<vmem>>, vector<1x16xf32>
        %58 = arith.mulf %57, %56 : vector<1x16xf32>
        %c0_39 = arith.constant 0 : index
        %c0_40 = arith.constant 0 : index
        %59 = vector.load %arg11[%c0_39, %c0_40] : memref<1x16xf32, #tpu.memory_space<vmem>>, vector<1x16xf32>
        tpu.vector_store %arg11[%c0_39, %c0_40], %58 {strides = array<i32>} : memref<1x16xf32, #tpu.memory_space<vmem>>, vector<1x16xf32>,
        %c0_41 = arith.constant 0 : index
        %c0_42 = arith.constant 0 : index
        %60 = vector.load %arg7[%c0_41, %c0_42] : memref<1x16xf32, #tpu.memory_space<vmem>>, vector<1x16xf32>
        %61 = arith.mulf %48, %58 : vector<1x16xf32>
        %62 = arith.subf %60, %61 : vector<1x16xf32>
        %c0_43 = arith.constant 0 : index
        %c0_44 = arith.constant 0 : index
        %63 = vector.load %arg12[%c0_43, %c0_44] : memref<1x16xf32, #tpu.memory_space<vmem>>, vector<1x16xf32>
        tpu.vector_store %arg12[%c0_43, %c0_44], %62 {strides = array<i32>} : memref<1x16xf32, #tpu.memory_space<vmem>>, vector<1x16xf32>,
      } else {
      }
    } else {
    }
    %c1_i32 = arith.constant 1 : i32
    %25 = arith.cmpi eq, %arg0, %c1_i32 : i32
    %26 = arith.extui %25 : i1 to i32
    %c0_i32_13 = arith.constant 0 : i32
    %27 = arith.cmpi ne, %26, %c0_i32_13 : i32
    scf.if %27 {
      %c0_14 = arith.constant 0 : index
      %c0_15 = arith.constant 0 : index
      %28 = vector.load %arg11[%c0_14, %c0_15] : memref<1x16xf32, #tpu.memory_space<vmem>>, vector<1x16xf32>
      %29 = vector.broadcast %28 : vector<1x16xf32> to vector<128x16xf32>
      %30 = arith.mulf %21, %29 : vector<128x16xf32>
      %c0_16 = arith.constant 0 : index
      %c0_17 = arith.constant 0 : index
      %31 = vector.load %arg12[%c0_16, %c0_17] : memref<1x16xf32, #tpu.memory_space<vmem>>, vector<1x16xf32>
      %32 = vector.broadcast %31 : vector<1x16xf32> to vector<128x16xf32>
      %33 = arith.addf %30, %32 : vector<128x16xf32>
      %c0_18 = arith.constant 0 : index
      %c0_19 = arith.constant 0 : index
      %34 = vector.load %arg8[%c0_18, %c0_19] : memref<128x16xf32, #tpu.memory_space<vmem>>, vector<128x16xf32>
      tpu.vector_store %arg8[%c0_18, %c0_19], %33 {strides = array<i32>} : memref<128x16xf32, #tpu.memory_space<vmem>>, vector<128x16xf32>,
    } else {
    }
    return
  }
  func.func @transform_0(%arg0: i32, %arg1: i32) -> (i32, i32) {
    %c0_i32 = arith.constant 0 : i32
    %c0_i32_0 = arith.constant 0 : i32
    return %arg1, %c0_i32 : i32, i32
  }
  func.func @transform_1(%arg0: i32, %arg1: i32) -> (i32, i32) {
    %c0_i32 = arith.constant 0 : i32
    %c0_i32_0 = arith.constant 0 : i32
    %c0_i32_1 = arith.constant 0 : i32
    return %c0_i32, %c0_i32_0 : i32, i32
  }
  func.func @transform_2(%arg0: i32, %arg1: i32) -> (i32, i32) {
    %c0_i32 = arith.constant 0 : i32
    %c0_i32_0 = arith.constant 0 : i32
    %c0_i32_1 = arith.constant 0 : i32
    return %c0_i32, %c0_i32_0 : i32, i32
  }
  func.func @transform_3(%arg0: i32, %arg1: i32) -> (i32, i32) {
    %c0_i32 = arith.constant 0 : i32
    %c0_i32_0 = arith.constant 0 : i32
    %c0_i32_1 = arith.constant 0 : i32
    return %c0_i32, %c0_i32_0 : i32, i32
  }
  func.func @transform_4(%arg0: i32, %arg1: i32) -> (i32, i32) {
    %c0_i32 = arith.constant 0 : i32
    %c0_i32_0 = arith.constant 0 : i32
    %c0_i32_1 = arith.constant 0 : i32
    return %c0_i32, %c0_i32_0 : i32, i32
  }
  func.func @transform_5(%arg0: i32, %arg1: i32) -> (i32, i32) {
    %c0_i32 = arith.constant 0 : i32
    %c0_i32_0 = arith.constant 0 : i32
    %c0_i32_1 = arith.constant 0 : i32
    return %c0_i32, %c0_i32_0 : i32, i32
  }
  func.func @transform_6(%arg0: i32, %arg1: i32) -> (i32, i32) {
    %c0_i32 = arith.constant 0 : i32
    %c0_i32_0 = arith.constant 0 : i32
    return %arg1, %c0_i32 : i32, i32
  }
}

</mosaic_0001>

<llo_original>
// kernel: tpu_custom_call.1
$region0: #{tpu_custom_call.1}
  #allocation0 [shape = 'u32[]', space=smem, size = 0x4, offset = 0x4, fixed_abs, tag = 'smem constant byte address 0x4 - core index']
  #allocation1 [shape = 'u32[144,128]{1,0:T(1,128)}', space=vmem, size = 0x12000, scoped, tag = 'internal scratch']
  #allocation2 [shape = 'f32[1,16]{1,0:T(1,128)}', space=vmem, size = 0x200, scoped, tag = 'scratch operand']
  #allocation3 [shape = 'f32[1,16]{1,0:T(1,128)}', space=vmem, size = 0x200, scoped, tag = 'scratch operand']
  #allocation4 [shape = 'f32[1,16]{1,0:T(1,128)}', space=vmem, size = 0x200, scoped, tag = 'scratch operand']
  #allocation5 [shape = 'f32[1,16]{1,0:T(1,128)}', space=vmem, size = 0x200, scoped, tag = 'scratch operand']
  %s0 = inlined_call_operand.vmem [shape: bf16[128,16], index: 0, kind: input, shape index: {}]
  %s1 = inlined_call_operand.vmem [shape: bf16[16,32], index: 1, kind: input, shape index: {}]
  %s2 = inlined_call_operand.vmem [shape: f32[1,32], index: 2, kind: input, shape index: {}]
  %s3 = inlined_call_operand.vmem [shape: bf16[32,16], index: 3, kind: input, shape index: {}]
  %s4 = inlined_call_operand.vmem [shape: f32[1,16], index: 4, kind: input, shape index: {}]
  %s5 = inlined_call_operand.vmem [shape: f32[1,16], index: 5, kind: input, shape index: {}]
  %s6 = inlined_call_operand.vmem [shape: f32[128,16], index: 6, kind: output, shape index: {}]
  %s7 = sld [smem:[#allocation0]]
  $region73: #{tpu_custom_call.1} parent=0
    _
  %s9 = ssub.s32 1, %s7
  %s10 = scalar_select 0, %s9, %s7
  loop: start=0, step=1, limit=4
  $region2: #{tpu_custom_call.1} parent=0 // loop_pre_header
    _
  $region3: #{tpu_custom_call.1} parent=0 // loop_header
    %s12 = sphi 0, %s16
    %p13 = scmp.ge.s32.totalorder %s12, 4
    %s19 = sphi 0, %s31
    %s20 = sphi 0, %s27
    %s21 = sphi 0, %s19
    %s22 = sphi 0, %s20
    %s23 = sphi 0, %s21
    %s24 = sphi 0, %s22
    %s34 = sphi 0, %s36
    %s37 = sphi 0, %s34
    %s38 = sphi 0, %s37
    %s54 = sphi 0, %s38
    %s58 = sphi 0, %s58
    %s60 = sphi 0, %s58
    %s61 = sphi 0, %s60
    %s75 = sphi 0, %s61
    %s79 = sphi 0, %s79
    %s81 = sphi 0, %s79
    %s82 = sphi 0, %s81
    %s96 = sphi 0, %s82
    %s100 = sphi 0, %s100
    %s102 = sphi 0, %s100
    %s103 = sphi 0, %s102
    %s117 = sphi 0, %s103
    %s121 = sphi 0, %s121
    %s123 = sphi 0, %s121
    %s124 = sphi 0, %s123
    %s138 = sphi 0, %s124
    %s142 = sphi 0, %s142
    %s144 = sphi 0, %s142
    %s145 = sphi 0, %s144
    %s159 = sphi 0, %s145
    %s165 = sphi 0, %s167
    %s168 = sphi 0, %s165
    %s169 = sphi 0, %s168
    %s185 = sphi 0, %s169
  $region4: #{tpu_custom_call.1} parent=0 // loop_header_branch
    %15 = sbr.rel (%p13) target = $region8
  $region5: #{tpu_custom_call.1} parent=0 // loop_body
    %s17 = ssub.s32 %s12, 1
    %s18 = ssub.s32 %s12, 2
    %s25 = sadd.s32 1, %s20
    %p26 = scmp.ge.s32.totalorder %s25, 1
    %s27 = scalar_select %p26, 0, %s25
    %s28 = sadd.s32 1, %s19
    %s29 = scalar_select %p26, %s28, %s19
    %p30 = scmp.ge.s32.totalorder %s29, 2
    %s31 = scalar_select %p30, 0, %s29
    %s32 = ssub.s32 %s20, %s27
    %p33 = scmp.eq.s32.totalorder %s32, 0
    %s35 = sadd.s32 %s34, 1
    %s36 = scalar_select %p33, %s34, %s35
    %p39 = pneg %p33
    %p40 = scmp.eq.s32.totalorder %s12, 1
    %p41 = por %p39, %p40
    %p42 = scmp.ne.s32.totalorder %s34, %s37
    %p43 = scmp.eq.s32.totalorder %s12, 0
    %p44 = por %p42, %p43
    %p45 = scmp.ne.s32.totalorder %s34, %s37
    %p46 = scmp.eq.s32.totalorder %s17, 1
    %p47 = por %p45, %p46
    %p48 = scmp.ne.s32.totalorder %s37, %s38
    %p49 = scmp.eq.s32.totalorder %s17, 0
    %p50 = por %p48, %p49
    %p51 = scmp.ne.s32.totalorder %s37, %s38
    %p52 = scmp.eq.s32.totalorder %s18, 1
    %p53 = por %p51, %p52
    %p55 = scmp.ne.s32.totalorder %s38, %s54
    %p56 = scmp.eq.s32.totalorder %s18, 0
    %p57 = por %p55, %p56
    %s59 = sadd.s32 %s58, 1
    %p62 = scmp.eq.s32.totalorder %s12, 1
    %p63 = scmp.ne.s32.totalorder %s58, %s60
    %p64 = scmp.eq.s32.totalorder %s12, 0
    %p65 = por %p63, %p64
    %p66 = scmp.ne.s32.totalorder %s58, %s60
    %p67 = scmp.eq.s32.totalorder %s17, 1
    %p68 = por %p66, %p67
    %p69 = scmp.ne.s32.totalorder %s60, %s61
    %p70 = scmp.eq.s32.totalorder %s17, 0
    %p71 = por %p69, %p70
    %p72 = scmp.ne.s32.totalorder %s60, %s61
    %p73 = scmp.eq.s32.totalorder %s18, 1
    %p74 = por %p72, %p73
    %p76 = scmp.ne.s32.totalorder %s61, %s75
    %p77 = scmp.eq.s32.totalorder %s18, 0
    %p78 = por %p76, %p77
    %s80 = sadd.s32 %s79, 1
    %p83 = scmp.eq.s32.totalorder %s12, 1
    %p84 = scmp.ne.s32.totalorder %s79, %s81
    %p85 = scmp.eq.s32.totalorder %s12, 0
    %p86 = por %p84, %p85
    %p87 = scmp.ne.s32.totalorder %s79, %s81
    %p88 = scmp.eq.s32.totalorder %s17, 1
    %p89 = por %p87, %p88
    %p90 = scmp.ne.s32.totalorder %s81, %s82
    %p91 = scmp.eq.s32.totalorder %s17, 0
    %p92 = por %p90, %p91
    %p93 = scmp.ne.s32.totalorder %s81, %s82
    %p94 = scmp.eq.s32.totalorder %s18, 1
    %p95 = por %p93, %p94
    %p97 = scmp.ne.s32.totalorder %s82, %s96
    %p98 = scmp.eq.s32.totalorder %s18, 0
    %p99 = por %p97, %p98
    %s101 = sadd.s32 %s100, 1
    %p104 = scmp.eq.s32.totalorder %s12, 1
    %p105 = scmp.ne.s32.totalorder %s100, %s102
    %p106 = scmp.eq.s32.totalorder %s12, 0
    %p107 = por %p105, %p106
    %p108 = scmp.ne.s32.totalorder %s100, %s102
    %p109 = scmp.eq.s32.totalorder %s17, 1
    %p110 = por %p108, %p109
    %p111 = scmp.ne.s32.totalorder %s102, %s103
    %p112 = scmp.eq.s32.totalorder %s17, 0
    %p113 = por %p111, %p112
    %p114 = scmp.ne.s32.totalorder %s102, %s103
    %p115 = scmp.eq.s32.totalorder %s18, 1
    %p116 = por %p114, %p115
    %p118 = scmp.ne.s32.totalorder %s103, %s117
    %p119 = scmp.eq.s32.totalorder %s18, 0
    %p120 = por %p118, %p119
    %s122 = sadd.s32 %s121, 1
    %p125 = scmp.eq.s32.totalorder %s12, 1
    %p126 = scmp.ne.s32.totalorder %s121, %s123
    %p127 = scmp.eq.s32.totalorder %s12, 0
    %p128 = por %p126, %p127
    %p129 = scmp.ne.s32.totalorder %s121, %s123
    %p130 = scmp.eq.s32.totalorder %s17, 1
    %p131 = por %p129, %p130
    %p132 = scmp.ne.s32.totalorder %s123, %s124
    %p133 = scmp.eq.s32.totalorder %s17, 0
    %p134 = por %p132, %p133
    %p135 = scmp.ne.s32.totalorder %s123, %s124
    %p136 = scmp.eq.s32.totalorder %s18, 1
    %p137 = por %p135, %p136
    %p139 = scmp.ne.s32.totalorder %s124, %s138
    %p140 = scmp.eq.s32.totalorder %s18, 0
    %p141 = por %p139, %p140
    %s143 = sadd.s32 %s142, 1
    %p146 = scmp.eq.s32.totalorder %s12, 1
    %p147 = scmp.ne.s32.totalorder %s142, %s144
    %p148 = scmp.eq.s32.totalorder %s12, 0
    %p149 = por %p147, %p148
    %p150 = scmp.ne.s32.totalorder %s142, %s144
    %p151 = scmp.eq.s32.totalorder %s17, 1
    %p152 = por %p150, %p151
    %p153 = scmp.ne.s32.totalorder %s144, %s145
    %p154 = scmp.eq.s32.totalorder %s17, 0
    %p155 = por %p153, %p154
    %p156 = scmp.ne.s32.totalorder %s144, %s145
    %p157 = scmp.eq.s32.totalorder %s18, 1
    %p158 = por %p156, %p157
    %p160 = scmp.ne.s32.totalorder %s145, %s159
    %p161 = scmp.eq.s32.totalorder %s18, 0
    %p162 = por %p160, %p161
    %s163 = ssub.s32 %s20, %s27
    %p164 = scmp.eq.s32.totalorder %s163, 0
    %s166 = sadd.s32 %s165, 1
    %s167 = scalar_select %p164, %s165, %s166
    %p170 = pneg %p164
    %p171 = scmp.eq.s32.totalorder %s12, 1
    %p172 = por %p170, %p171
    %p173 = scmp.ne.s32.totalorder %s165, %s168
    %p174 = scmp.eq.s32.totalorder %s12, 0
    %p175 = por %p173, %p174
    %p176 = scmp.ne.s32.totalorder %s165, %s168
    %p177 = scmp.eq.s32.totalorder %s17, 1
    %p178 = por %p176, %p177
    %p179 = scmp.ne.s32.totalorder %s168, %s169
    %p180 = scmp.eq.s32.totalorder %s17, 0
    %p181 = por %p179, %p180
    %p182 = scmp.ne.s32.totalorder %s168, %s169
    %p183 = scmp.eq.s32.totalorder %s18, 1
    %p184 = por %p182, %p183
    %p186 = scmp.ne.s32.totalorder %s169, %s185
    %p187 = scmp.eq.s32.totalorder %s18, 0
    %p188 = por %p186, %p187
    %p189 = scmp.le.s32.totalorder 1, %s12
    %p190 = scmp.lt.s32.totalorder %s12, 3
    %p191 = pnand %p189, %p190
    %p192 = pneg %p191
    // Predicated region
    $region9: #{tpu_custom_call.1} parent=5 // pred_check
      _
    $region10: #{tpu_custom_call.1} parent=5 // pred_check_branch
      %194 = sbr.rel (%p191) target = $region12
    $region11: #{tpu_custom_call.1} parent=5 // pred_region
      %s195 = ssub.s32 %s12, 1
      // Predicated region
      $region13: #{tpu_custom_call.1} parent=11 // pred_check
        %p196 = pneg %p50
      $region14: #{tpu_custom_call.1} parent=11 // pred_check_branch
        %198 = sbr.rel (%p196) target = $region16
      $region15: #{tpu_custom_call.1} parent=11 // pred_region
        %s199 = smul.u32 16, %s22
        %p200 = scmp.lt.s32.totalorder %s199, 15
        %s201 = scalar_select %p200, %s199, 15
        %s202 = smul.addr %s201, 4
        %s203 = scalar_lea.vmem %s0, %s202
        %s204 = smul.u32 16, %s22
      $region16: #{tpu_custom_call.1} parent=11 // pred_fallthru
        _
      // Predicated region
      $region17: #{tpu_custom_call.1} parent=11 // pred_check
        %p205 = pneg %p71
      $region18: #{tpu_custom_call.1} parent=11 // pred_check_branch
        %207 = sbr.rel (%p205) target = $region20
      $region19: #{tpu_custom_call.1} parent=11 // pred_region
        _
      $region20: #{tpu_custom_call.1} parent=11 // pred_fallthru
        _
      // Predicated region
      $region21: #{tpu_custom_call.1} parent=11 // pred_check
        %p208 = pneg %p92
      $region22: #{tpu_custom_call.1} parent=11 // pred_check_branch
        %210 = sbr.rel (%p208) target = $region24
      $region23: #{tpu_custom_call.1} parent=11 // pred_region
        _
      $region24: #{tpu_custom_call.1} parent=11 // pred_fallthru
        _
      // Predicated region
      $region25: #{tpu_custom_call.1} parent=11 // pred_check
        %p211 = pneg %p113
      $region26: #{tpu_custom_call.1} parent=11 // pred_check_branch
        %213 = sbr.rel (%p211) target = $region28
      $region27: #{tpu_custom_call.1} parent=11 // pred_region
        _
      $region28: #{tpu_custom_call.1} parent=11 // pred_fallthru
        _
      // Predicated region
      $region29: #{tpu_custom_call.1} parent=11 // pred_check
        %p214 = pneg %p134
      $region30: #{tpu_custom_call.1} parent=11 // pred_check_branch
        %216 = sbr.rel (%p214) target = $region32
      $region31: #{tpu_custom_call.1} parent=11 // pred_region
        _
      $region32: #{tpu_custom_call.1} parent=11 // pred_fallthru
        _
      // Predicated region
      $region33: #{tpu_custom_call.1} parent=11 // pred_check
        %p217 = pneg %p155
      $region34: #{tpu_custom_call.1} parent=11 // pred_check_branch
        %219 = sbr.rel (%p217) target = $region36
      $region35: #{tpu_custom_call.1} parent=11 // pred_region
        _
      $region36: #{tpu_custom_call.1} parent=11 // pred_fallthru
        _
    $region12: #{tpu_custom_call.1} parent=5 // pred_fallthru
      _
    %p220 = scmp.lt.s32.totalorder %s12, 2
    // Predicated region
    $region37: #{tpu_custom_call.1} parent=5 // pred_check
      %p221 = pneg %p220
    $region38: #{tpu_custom_call.1} parent=5 // pred_check_branch
      %223 = sbr.rel (%p221) target = $region40
    $region39: #{tpu_custom_call.1} parent=5 // pred_region
      _
    $region40: #{tpu_custom_call.1} parent=5 // pred_fallthru
      _
    %p224 = scmp.le.s32.totalorder 1, %s12
    %p225 = scmp.lt.s32.totalorder %s12, 3
    %p226 = pnand %p224, %p225
    %p227 = pneg %p226
    // Predicated region
    $region41: #{tpu_custom_call.1} parent=5 // pred_check
      _
    $region42: #{tpu_custom_call.1} parent=5 // pred_check_branch
      %229 = sbr.rel (%p226) target = $region44
    $region43: #{tpu_custom_call.1} parent=5 // pred_region
      %s230 = ssub.s32 %s12, 1
      %s231 = smul.u32 16, %s22
      %p232 = scmp.lt.s32.totalorder %s231, 15
      %s233 = scalar_select %p232, %s231, 15
      %s234 = smul.addr %s233, 4
      %s235 = scalar_lea.vmem %s0, %s234
      %p236 = pneg %p50
      %p237 = pneg %p47
      %p238 = pneg %p71
      %p239 = pneg %p68
      %p240 = pneg %p92
      %p241 = pneg %p89
      %p242 = pneg %p113
      %p243 = pneg %p110
      %p244 = pneg %p134
      %p245 = pneg %p131
      %p246 = pneg %p155
      %p247 = pneg %p152
      %p248 = pneg %p181
      %p249 = pneg %p178
      %s250 = smul.u32 16, %s22
      %p251 = scmp.lt.s32.totalorder %s250, 15
      %s252 = scalar_select %p251, %s250, 15
      %s253 = smul.addr %s252, 8
      %s254 = scalar_lea.vmem %s6, %s253
      %s255 = smul.u32 16, %s22
      %p256 = scmp.lt.s32.totalorder %s255, 15
      %s257 = scalar_select %p256, %s255, 15
      %s258 = smul.addr %s257, 4
      %s259 = scalar_lea.vmem %s0, %s258
      %s260 = smul.u32 16, %s22
      %s261 = smul.u32 16, %s22
      %p262 = scmp.lt.s32.totalorder %s261, 15
      %s263 = scalar_select %p262, %s261, 15
      %s264 = smul.addr %s263, 8
      %s265 = scalar_lea.vmem %s6, %s264
      %s266 = smul.u32 16, %s22
      %v268 = vld [vmem:[%s259] sm:$0xf]
      %v269 = vld [vmem:[%s259 + $0x4] sm:$0xf]
      %v270 = vld [vmem:[%s259 + $0x8] sm:$0xf]
      %v271 = vld [vmem:[%s259 + $0xc] sm:$0xf]
      %v272 = vld [vmem:[%s259 + $0x10] sm:$0xf]
      %v273 = vld [vmem:[%s259 + $0x14] sm:$0xf]
      %v274 = vld [vmem:[%s259 + $0x18] sm:$0xf]
      %v275 = vld [vmem:[%s259 + $0x1c] sm:$0xf]
      %v276 = vld [vmem:[%s259 + $0x20] sm:$0xf]
      %v277 = vld [vmem:[%s259 + $0x24] sm:$0xf]
      %v278 = vld [vmem:[%s259 + $0x28] sm:$0xf]
      %v279 = vld [vmem:[%s259 + $0x2c] sm:$0xf]
      %v280 = vld [vmem:[%s259 + $0x30] sm:$0xf]
      %v281 = vld [vmem:[%s259 + $0x34] sm:$0xf]
      %v282 = vld [vmem:[%s259 + $0x38] sm:$0xf]
      %v283 = vld [vmem:[%s259 + $0x3c] sm:$0xf]
      %v284 = vld [vmem:[%s1] sm:$0xf]
      %v285 = vld [vmem:[%s1 + $0x4] sm:$0xf]
      %v286 = vld [vmem:[%s2] sm:$0x1]
      %v288 = vlaneseq
      %v289 = vshrl.u32 %v288, 7
      %v290 = vsub.s32 0, %v289
      %v291 = vrot.slane %v286, %v290
      %v309 = vunpack.c.l.b16 %v268
      %v310 = vunpack.c.l.b16 %v269
      %v311 = vunpack.c.l.b16 %v270
      %v312 = vunpack.c.l.b16 %v271
      %v313 = vunpack.c.l.b16 %v272
      %v314 = vunpack.c.l.b16 %v273
      %v315 = vunpack.c.l.b16 %v274
      %v316 = vunpack.c.l.b16 %v275
      %v317 = vunpack.c.l.b16 %v276
      %v318 = vunpack.c.l.b16 %v277
      %v319 = vunpack.c.l.b16 %v278
      %v320 = vunpack.c.l.b16 %v279
      %v321 = vunpack.c.l.b16 %v280
      %v322 = vunpack.c.l.b16 %v281
      %v323 = vunpack.c.l.b16 %v282
      %v324 = vunpack.c.l.b16 %v283
      %v325 = vpack.c.b16 %v310, %v309
      %v326 = vpack.c.b16 %v312, %v311
      %v327 = vpack.c.b16 %v314, %v313
      %v328 = vpack.c.b16 %v316, %v315
      %v329 = vpack.c.b16 %v318, %v317
      %v330 = vpack.c.b16 %v320, %v319
      %v331 = vpack.c.b16 %v322, %v321
      %v332 = vpack.c.b16 %v324, %v323
      %v335 = vunpack.c.l.b16 %v284
      %v336 = vunpack.c.l.b16 %v285
      %v337 = vpack.c.b16 %v336, %v335
      %vm339 = vcmask 130048
      %v341 = vsel %vm339, %v325, 0
      %v344 = vsel %vm339, %v326, 0
      %v347 = vsel %vm339, %v327, 0
      %v350 = vsel %vm339, %v328, 0
      %v353 = vsel %vm339, %v329, 0
      %v356 = vsel %vm339, %v330, 0
      %v359 = vsel %vm339, %v331, 0
      %v362 = vsel %vm339, %v332, 0
      %364 = vmatprep.subr.bf16.mxu0 0
      %365 = vmatpush1.bf16.msra.mxu0 %v337
      %366 = vmatprep.subr.bf16.mxu0 0
      %367 = vmatpush1.bf16.msra.mxu0 0
      %368 = vmatprep.subr.bf16.mxu0 0
      %369 = vmatpush1.bf16.msra.mxu0 0
      %370 = vmatprep.subr.bf16.mxu0 0
      %371 = vmatpush1.bf16.msra.mxu0 0
      %372 = vmatprep.subr.bf16.mxu0 0
      %373 = vmatpush1.bf16.msra.mxu0 0
      %374 = vmatprep.subr.bf16.mxu0 0
      %375 = vmatpush1.bf16.msra.mxu0 0
      %376 = vmatprep.subr.bf16.mxu0 0
      %377 = vmatpush1.bf16.msra.mxu0 0
      %378 = vmatprep.subr.bf16.mxu0 0
      %379 = vmatpush1.bf16.msra.mxu0 0
      %380 = vmatprep.subr.bf16.mxu0 0
      %381 = vmatpush1.bf16.msra.mxu0 0
      %382 = vmatprep.subr.bf16.mxu0 0
      %383 = vmatpush1.bf16.msra.mxu0 0
      %384 = vmatprep.subr.bf16.mxu0 0
      %385 = vmatpush1.bf16.msra.mxu0 0
      %386 = vmatprep.subr.bf16.mxu0 0
      %387 = vmatpush1.bf16.msra.mxu0 0
      %388 = vmatprep.subr.bf16.mxu0 0
      %389 = vmatpush1.bf16.msra.mxu0 0
      %390 = vmatprep.subr.bf16.mxu0 0
      %391 = vmatpush1.bf16.msra.mxu0 0
      %392 = vmatprep.subr.bf16.mxu0 0
      %393 = vmatpush1.bf16.msra.mxu0 0
      %394 = vmatprep.subr.bf16.mxu0 0
      %395 = vmatpush1.bf16.msra.mxu0 0
      %396 = vmatprep.mubr.bf16.mxu0 0
      %397 = vmatmul.mubr.bf16.gmra.mrb[0].mxu0 %v341
      %v398 = vpop.f32.mrb[0].mxu0
      %v399 = vadd.f32 %v291, %v398
      %v400 = vpop.f32.mrb[0].mxu0
      %v401 = vpop.f32.mrb[0].mxu0
      %v402 = vadd.f32 %v291, %v401
      %v403 = vpop.f32.mrb[0].mxu0
      %404 = vmatprep.mubr.bf16.mxu0 0
      %405 = vmatmul.mubr.bf16.gmra.mrb[0].mxu0 %v344
      %v406 = vpop.f32.mrb[0].mxu0
      %v407 = vadd.f32 %v291, %v406
      %v408 = vpop.f32.mrb[0].mxu0
      %v409 = vpop.f32.mrb[0].mxu0
      %v410 = vadd.f32 %v291, %v409
      %v411 = vpop.f32.mrb[0].mxu0
      %412 = vmatprep.mubr.bf16.mxu0 0
      %413 = vmatmul.mubr.bf16.gmra.mrb[0].mxu0 %v347
      %v414 = vpop.f32.mrb[0].mxu0
      %v415 = vadd.f32 %v291, %v414
      %v416 = vpop.f32.mrb[0].mxu0
      %v417 = vpop.f32.mrb[0].mxu0
      %v418 = vadd.f32 %v291, %v417
      %v419 = vpop.f32.mrb[0].mxu0
      %420 = vmatprep.mubr.bf16.mxu0 0
      %421 = vmatmul.mubr.bf16.gmra.mrb[0].mxu0 %v350
      %v422 = vpop.f32.mrb[0].mxu0
      %v423 = vadd.f32 %v291, %v422
      %v424 = vpop.f32.mrb[0].mxu0
      %v425 = vpop.f32.mrb[0].mxu0
      %v426 = vadd.f32 %v291, %v425
      %v427 = vpop.f32.mrb[0].mxu0
      %428 = vmatprep.mubr.bf16.mxu0 0
      %429 = vmatmul.mubr.bf16.gmra.mrb[0].mxu0 %v353
      %v430 = vpop.f32.mrb[0].mxu0
      %v431 = vadd.f32 %v291, %v430
      %v432 = vpop.f32.mrb[0].mxu0
      %v433 = vpop.f32.mrb[0].mxu0
      %v434 = vadd.f32 %v291, %v433
      %v435 = vpop.f32.mrb[0].mxu0
      %436 = vmatprep.mubr.bf16.mxu0 0
      %437 = vmatmul.mubr.bf16.gmra.mrb[0].mxu0 %v356
      %v438 = vpop.f32.mrb[0].mxu0
      %v439 = vadd.f32 %v291, %v438
      %v440 = vpop.f32.mrb[0].mxu0
      %v441 = vpop.f32.mrb[0].mxu0
      %v442 = vadd.f32 %v291, %v441
      %v443 = vpop.f32.mrb[0].mxu0
      %444 = vmatprep.mubr.bf16.mxu0 0
      %445 = vmatmul.mubr.bf16.gmra.mrb[0].mxu0 %v359
      %v446 = vpop.f32.mrb[0].mxu0
      %v447 = vadd.f32 %v291, %v446
      %v448 = vpop.f32.mrb[0].mxu0
      %v449 = vpop.f32.mrb[0].mxu0
      %v450 = vadd.f32 %v291, %v449
      %v451 = vpop.f32.mrb[0].mxu0
      %452 = vmatprep.mubr.bf16.mxu0 0
      %453 = vmatmul.mubr.bf16.gmra.mrb[0].mxu0 %v362
      %v454 = vpop.f32.mrb[0].mxu0
      %v455 = vadd.f32 %v291, %v454
      %v456 = vpop.f32.mrb[0].mxu0
      %v457 = vpop.f32.mrb[0].mxu0
      %v458 = vadd.f32 %v291, %v457
      %v459 = vpop.f32.mrb[0].mxu0
      %460 = vdwg.mxu0
      %v461 = vmul.f32 %v399, %v399
      %v462 = vmul.f32 %v402, %v402
      %v463 = vmul.f32 %v407, %v407
      %v464 = vmul.f32 %v410, %v410
      %v465 = vmul.f32 %v415, %v415
      %v466 = vmul.f32 %v418, %v418
      %v467 = vmul.f32 %v423, %v423
      %v468 = vmul.f32 %v426, %v426
      %v469 = vmul.f32 %v431, %v431
      %v470 = vmul.f32 %v434, %v434
      %v471 = vmul.f32 %v439, %v439
      %v472 = vmul.f32 %v442, %v442
      %v473 = vmul.f32 %v447, %v447
      %v474 = vmul.f32 %v450, %v450
      %v475 = vmul.f32 %v455, %v455
      %v476 = vmul.f32 %v458, %v458
      %v477 = vmul.f32 %v399, %v461
      %v478 = vmul.f32 %v402, %v462
      %v479 = vmul.f32 %v407, %v463
      %v480 = vmul.f32 %v410, %v464
      %v481 = vmul.f32 %v415, %v465
      %v482 = vmul.f32 %v418, %v466
      %v483 = vmul.f32 %v423, %v467
      %v484 = vmul.f32 %v426, %v468
      %v485 = vmul.f32 %v431, %v469
      %v486 = vmul.f32 %v434, %v470
      %v487 = vmul.f32 %v439, %v471
      %v488 = vmul.f32 %v442, %v472
      %v489 = vmul.f32 %v447, %v473
      %v490 = vmul.f32 %v450, %v474
      %v491 = vmul.f32 %v455, %v475
      %v492 = vmul.f32 %v458, %v476
      %v493 = vmul.f32 %v477, 0.044715
      %v494 = vmul.f32 %v478, 0.044715
      %v495 = vmul.f32 %v479, 0.044715
      %v496 = vmul.f32 %v480, 0.044715
      %v497 = vmul.f32 %v481, 0.044715
      %v498 = vmul.f32 %v482, 0.044715
      %v499 = vmul.f32 %v483, 0.044715
      %v500 = vmul.f32 %v484, 0.044715
      %v501 = vmul.f32 %v485, 0.044715
      %v502 = vmul.f32 %v486, 0.044715
      %v503 = vmul.f32 %v487, 0.044715
      %v504 = vmul.f32 %v488, 0.044715
      %v505 = vmul.f32 %v489, 0.044715
      %v506 = vmul.f32 %v490, 0.044715
      %v507 = vmul.f32 %v491, 0.044715
      %v508 = vmul.f32 %v492, 0.044715
      %v509 = vadd.f32 %v399, %v493
      %v510 = vadd.f32 %v402, %v494
      %v511 = vadd.f32 %v407, %v495
      %v512 = vadd.f32 %v410, %v496
      %v513 = vadd.f32 %v415, %v497
      %v514 = vadd.f32 %v418, %v498
      %v515 = vadd.f32 %v423, %v499
      %v516 = vadd.f32 %v426, %v500
      %v517 = vadd.f32 %v431, %v501
      %v518 = vadd.f32 %v434, %v502
      %v519 = vadd.f32 %v439, %v503
      %v520 = vadd.f32 %v442, %v504
      %v521 = vadd.f32 %v447, %v505
      %v522 = vadd.f32 %v450, %v506
      %v523 = vadd.f32 %v455, %v507
      %v524 = vadd.f32 %v458, %v508
      %v525 = vmul.f32 %v509, 0.7978846
      %v526 = vmul.f32 %v510, 0.7978846
      %v527 = vmul.f32 %v511, 0.7978846
      %v528 = vmul.f32 %v512, 0.7978846
      %v529 = vmul.f32 %v513, 0.7978846
      %v530 = vmul.f32 %v514, 0.7978846
      %v531 = vmul.f32 %v515, 0.7978846
      %v532 = vmul.f32 %v516, 0.7978846
      %v533 = vmul.f32 %v517, 0.7978846
      %v534 = vmul.f32 %v518, 0.7978846
      %v535 = vmul.f32 %v519, 0.7978846
      %v536 = vmul.f32 %v520, 0.7978846
      %v537 = vmul.f32 %v521, 0.7978846
      %v538 = vmul.f32 %v522, 0.7978846
      %v539 = vmul.f32 %v523, 0.7978846
      %v540 = vmul.f32 %v524, 0.7978846
      %v541 = vtanh.pop %v525
      %v542 = vtanh.pop %v526
      %v543 = vtanh.pop %v527
      %v544 = vtanh.pop %v528
      %v545 = vtanh.pop %v529
      %v546 = vtanh.pop %v530
      %v547 = vtanh.pop %v531
      %v548 = vtanh.pop %v532
      %v549 = vtanh.pop %v533
      %v550 = vtanh.pop %v534
      %v551 = vtanh.pop %v535
      %v552 = vtanh.pop %v536
      %v553 = vtanh.pop %v537
      %v554 = vtanh.pop %v538
      %v555 = vtanh.pop %v539
      %v556 = vtanh.pop %v540
      %v557 = vadd.f32 %v541, 1.0
      %v558 = vadd.f32 %v542, 1.0
      %v559 = vadd.f32 %v543, 1.0
      %v560 = vadd.f32 %v544, 1.0
      %v561 = vadd.f32 %v545, 1.0
      %v562 = vadd.f32 %v546, 1.0
      %v563 = vadd.f32 %v547, 1.0
      %v564 = vadd.f32 %v548, 1.0
      %v565 = vadd.f32 %v549, 1.0
      %v566 = vadd.f32 %v550, 1.0
      %v567 = vadd.f32 %v551, 1.0
      %v568 = vadd.f32 %v552, 1.0
      %v569 = vadd.f32 %v553, 1.0
      %v570 = vadd.f32 %v554, 1.0
      %v571 = vadd.f32 %v555, 1.0
      %v572 = vadd.f32 %v556, 1.0
      %v573 = vmul.f32 %v557, 0.5
      %v574 = vmul.f32 %v558, 0.5
      %v575 = vmul.f32 %v559, 0.5
      %v576 = vmul.f32 %v560, 0.5
      %v577 = vmul.f32 %v561, 0.5
      %v578 = vmul.f32 %v562, 0.5
      %v579 = vmul.f32 %v563, 0.5
      %v580 = vmul.f32 %v564, 0.5
      %v581 = vmul.f32 %v565, 0.5
      %v582 = vmul.f32 %v566, 0.5
      %v583 = vmul.f32 %v567, 0.5
      %v584 = vmul.f32 %v568, 0.5
      %v585 = vmul.f32 %v569, 0.5
      %v586 = vmul.f32 %v570, 0.5
      %v587 = vmul.f32 %v571, 0.5
      %v588 = vmul.f32 %v572, 0.5
      %v589 = vmul.f32 %v399, %v573
      %v590 = vmul.f32 %v402, %v574
      %v591 = vmul.f32 %v407, %v575
      %v592 = vmul.f32 %v410, %v576
      %v593 = vmul.f32 %v415, %v577
      %v594 = vmul.f32 %v418, %v578
      %v595 = vmul.f32 %v423, %v579
      %v596 = vmul.f32 %v426, %v580
      %v597 = vmul.f32 %v431, %v581
      %v598 = vmul.f32 %v434, %v582
      %v599 = vmul.f32 %v439, %v583
      %v600 = vmul.f32 %v442, %v584
      %v601 = vmul.f32 %v447, %v585
      %v602 = vmul.f32 %v450, %v586
      %v603 = vmul.f32 %v455, %v587
      %v604 = vmul.f32 %v458, %v588
      %v605 = vpack.c.bf16 %v590, %v589
      %v606 = vpack.c.bf16 %v592, %v591
      %v607 = vpack.c.bf16 %v594, %v593
      %v608 = vpack.c.bf16 %v596, %v595
      %v609 = vpack.c.bf16 %v598, %v597
      %v610 = vpack.c.bf16 %v600, %v599
      %v611 = vpack.c.bf16 %v602, %v601
      %v612 = vpack.c.bf16 %v604, %v603
      %v613 = vld [vmem:[%s3] sm:$0xf]
      %v614 = vld [vmem:[%s3 + $0x4] sm:$0xf]
      %v615 = vld [vmem:[%s3 + $0x8] sm:$0xf]
      %v616 = vld [vmem:[%s3 + $0xc] sm:$0xf]
      %v621 = vunpack.c.l.b16 %v613
      %v622 = vunpack.c.l.b16 %v614
      %v623 = vunpack.c.l.b16 %v615
      %v624 = vunpack.c.l.b16 %v616
      %v625 = vpack.c.b16 %v622, %v621
      %v626 = vpack.c.b16 %v624, %v623
      %vm629 = vcmask 261120
      %v631 = vsel %vm629, %v605, 0
      %v634 = vsel %vm629, %v606, 0
      %v637 = vsel %vm629, %v607, 0
      %v640 = vsel %vm629, %v608, 0
      %v643 = vsel %vm629, %v609, 0
      %v646 = vsel %vm629, %v610, 0
      %v649 = vsel %vm629, %v611, 0
      %v652 = vsel %vm629, %v612, 0
      %654 = vmatprep.subr.bf16.mxu0 0
      %655 = vmatpush1.bf16.msra.mxu0 %v625
      %656 = vmatprep.subr.bf16.mxu0 0
      %657 = vmatpush1.bf16.msra.mxu0 %v626
      %658 = vmatprep.subr.bf16.mxu0 0
      %659 = vmatpush1.bf16.msra.mxu0 0
      %660 = vmatprep.subr.bf16.mxu0 0
      %661 = vmatpush1.bf16.msra.mxu0 0
      %662 = vmatprep.subr.bf16.mxu0 0
      %663 = vmatpush1.bf16.msra.mxu0 0
      %664 = vmatprep.subr.bf16.mxu0 0
      %665 = vmatpush1.bf16.msra.mxu0 0
      %666 = vmatprep.subr.bf16.mxu0 0
      %667 = vmatpush1.bf16.msra.mxu0 0
      %668 = vmatprep.subr.bf16.mxu0 0
      %669 = vmatpush1.bf16.msra.mxu0 0
      %670 = vmatprep.subr.bf16.mxu0 0
      %671 = vmatpush1.bf16.msra.mxu0 0
      %672 = vmatprep.subr.bf16.mxu0 0
      %673 = vmatpush1.bf16.msra.mxu0 0
      %674 = vmatprep.subr.bf16.mxu0 0
      %675 = vmatpush1.bf16.msra.mxu0 0
      %676 = vmatprep.subr.bf16.mxu0 0
      %677 = vmatpush1.bf16.msra.mxu0 0
      %678 = vmatprep.subr.bf16.mxu0 0
      %679 = vmatpush1.bf16.msra.mxu0 0
      %680 = vmatprep.subr.bf16.mxu0 0
      %681 = vmatpush1.bf16.msra.mxu0 0
      %682 = vmatprep.subr.bf16.mxu0 0
      %683 = vmatpush1.bf16.msra.mxu0 0
      %684 = vmatprep.subr.bf16.mxu0 0
      %685 = vmatpush1.bf16.msra.mxu0 0
      %686 = vmatprep.mubr.bf16.mxu0 0
      %687 = vmatmul.mubr.bf16.gmra.mrb[0].mxu0 %v631
      %v688 = vpop.f32.mrb[0].mxu0
      %v689 = vadd.f32 0.0, %v688
      %v690 = vpop.f32.mrb[0].mxu0
      %v691 = vpop.f32.mrb[0].mxu0
      %v692 = vadd.f32 0.0, %v691
      %v693 = vpop.f32.mrb[0].mxu0
      %694 = vmatprep.mubr.bf16.mxu0 0
      %695 = vmatmul.mubr.bf16.gmra.mrb[0].mxu0 %v634
      %v696 = vpop.f32.mrb[0].mxu0
      %v697 = vadd.f32 0.0, %v696
      %v698 = vpop.f32.mrb[0].mxu0
      %v699 = vpop.f32.mrb[0].mxu0
      %v700 = vadd.f32 0.0, %v699
      %v701 = vpop.f32.mrb[0].mxu0
      %702 = vmatprep.mubr.bf16.mxu0 0
      %703 = vmatmul.mubr.bf16.gmra.mrb[0].mxu0 %v637
      %v704 = vpop.f32.mrb[0].mxu0
      %v705 = vadd.f32 0.0, %v704
      %v706 = vpop.f32.mrb[0].mxu0
      %v707 = vpop.f32.mrb[0].mxu0
      %v708 = vadd.f32 0.0, %v707
      %v709 = vpop.f32.mrb[0].mxu0
      %710 = vmatprep.mubr.bf16.mxu0 0
      %711 = vmatmul.mubr.bf16.gmra.mrb[0].mxu0 %v640
      %v712 = vpop.f32.mrb[0].mxu0
      %v713 = vadd.f32 0.0, %v712
      %v714 = vpop.f32.mrb[0].mxu0
      %v715 = vpop.f32.mrb[0].mxu0
      %v716 = vadd.f32 0.0, %v715
      %v717 = vpop.f32.mrb[0].mxu0
      %718 = vmatprep.mubr.bf16.mxu0 0
      %719 = vmatmul.mubr.bf16.gmra.mrb[0].mxu0 %v643
      %v720 = vpop.f32.mrb[0].mxu0
      %v721 = vadd.f32 0.0, %v720
      %v722 = vpop.f32.mrb[0].mxu0
      %v723 = vpop.f32.mrb[0].mxu0
      %v724 = vadd.f32 0.0, %v723
      %v725 = vpop.f32.mrb[0].mxu0
      %726 = vmatprep.mubr.bf16.mxu0 0
      %727 = vmatmul.mubr.bf16.gmra.mrb[0].mxu0 %v646
      %v728 = vpop.f32.mrb[0].mxu0
      %v729 = vadd.f32 0.0, %v728
      %v730 = vpop.f32.mrb[0].mxu0
      %v731 = vpop.f32.mrb[0].mxu0
      %v732 = vadd.f32 0.0, %v731
      %v733 = vpop.f32.mrb[0].mxu0
      %734 = vmatprep.mubr.bf16.mxu0 0
      %735 = vmatmul.mubr.bf16.gmra.mrb[0].mxu0 %v649
      %v736 = vpop.f32.mrb[0].mxu0
      %v737 = vadd.f32 0.0, %v736
      %v738 = vpop.f32.mrb[0].mxu0
      %v739 = vpop.f32.mrb[0].mxu0
      %v740 = vadd.f32 0.0, %v739
      %v741 = vpop.f32.mrb[0].mxu0
      %742 = vmatprep.mubr.bf16.mxu0 0
      %743 = vmatmul.mubr.bf16.gmra.mrb[0].mxu0 %v652
      %v744 = vpop.f32.mrb[0].mxu0
      %v745 = vadd.f32 0.0, %v744
      %v746 = vpop.f32.mrb[0].mxu0
      %v747 = vpop.f32.mrb[0].mxu0
      %v748 = vadd.f32 0.0, %v747
      %v749 = vpop.f32.mrb[0].mxu0
      %750 = vdwg.mxu0
      %p751 = scmp.eq.s32.totalorder %s21, 0
      // Predicated region
      $region45: #{tpu_custom_call.1} parent=43 // pred_check
        %p752 = pneg %p751
      $region46: #{tpu_custom_call.1} parent=43 // pred_check_branch
        %754 = sbr.rel (%p752) target = $region48
      $region47: #{tpu_custom_call.1} parent=43 // pred_region
        %p755 = scmp.eq.s32.totalorder %s22, 0
        // Predicated region
        $region49: #{tpu_custom_call.1} parent=47 // pred_check
          %p756 = pneg %p755
        $region50: #{tpu_custom_call.1} parent=47 // pred_check_branch
          %758 = sbr.rel (%p756) target = $region52
        $region51: #{tpu_custom_call.1} parent=47 // pred_region
          %vm759 = vcmask 122880
          %760 = vst.msk [vmem:[#allocation2] sm:$0x1] %vm759, 0.0
          %761 = vst.msk [vmem:[#allocation3] sm:$0x1] %vm759, 0.0
        $region52: #{tpu_custom_call.1} parent=47 // pred_fallthru
          _
        %v762 = vld [vmem:[#allocation2] sm:$0x1]
        %v763 = vsel %vm339, %v689, 0.0
        %v764 = vsel %vm339, %v692, 0.0
        %v765 = vadd.f32 %v763, %v764
        %v766 = vsel %vm339, %v697, 0.0
        %v767 = vadd.f32 %v765, %v766
        %v768 = vsel %vm339, %v700, 0.0
        %v769 = vadd.f32 %v767, %v768
        %v770 = vsel %vm339, %v705, 0.0
        %v771 = vadd.f32 %v769, %v770
        %v772 = vsel %vm339, %v708, 0.0
        %v773 = vadd.f32 %v771, %v772
        %v774 = vsel %vm339, %v713, 0.0
        %v775 = vadd.f32 %v773, %v774
        %v776 = vsel %vm339, %v716, 0.0
        %v777 = vadd.f32 %v775, %v776
        %v778 = vsel %vm339, %v721, 0.0
        %v779 = vadd.f32 %v777, %v778
        %v780 = vsel %vm339, %v724, 0.0
        %v781 = vadd.f32 %v779, %v780
        %v782 = vsel %vm339, %v729, 0.0
        %v783 = vadd.f32 %v781, %v782
        %v784 = vsel %vm339, %v732, 0.0
        %v785 = vadd.f32 %v783, %v784
        %v786 = vsel %vm339, %v737, 0.0
        %v787 = vadd.f32 %v785, %v786
        %v788 = vsel %vm339, %v740, 0.0
        %v789 = vadd.f32 %v787, %v788
        %v790 = vsel %vm339, %v745, 0.0
        %v791 = vadd.f32 %v789, %v790
        %v792 = vsel %vm339, %v748, 0.0
        %v793 = vadd.f32 %v791, %v792
        %v794 = vrot.slane %v793, 4
        %v795 = vadd.f32 %v793, %v794
        %v796 = vrot.slane %v795, 2
        %v797 = vadd.f32 %v795, %v796
        %v798 = vrot.slane %v797, 1
        %v799 = vadd.f32 %v797, %v798
        %v800 = vadd.f32 %v762, %v799
        %vm801 = vcmask 122880
        %802 = vst.msk [vmem:[#allocation2] sm:$0x1] %vm801, %v800
        %v803 = vld [vmem:[#allocation3] sm:$0x1]
        %v804 = vmul.f32 %v689, %v689
        %v805 = vmul.f32 %v692, %v692
        %v806 = vmul.f32 %v697, %v697
        %v807 = vmul.f32 %v700, %v700
        %v808 = vmul.f32 %v705, %v705
        %v809 = vmul.f32 %v708, %v708
        %v810 = vmul.f32 %v713, %v713
        %v811 = vmul.f32 %v716, %v716
        %v812 = vmul.f32 %v721, %v721
        %v813 = vmul.f32 %v724, %v724
        %v814 = vmul.f32 %v729, %v729
        %v815 = vmul.f32 %v732, %v732
        %v816 = vmul.f32 %v737, %v737
        %v817 = vmul.f32 %v740, %v740
        %v818 = vmul.f32 %v745, %v745
        %v819 = vmul.f32 %v748, %v748
        %v820 = vsel %vm339, %v804, 0.0
        %v821 = vsel %vm339, %v805, 0.0
        %v822 = vadd.f32 %v820, %v821
        %v823 = vsel %vm339, %v806, 0.0
        %v824 = vadd.f32 %v822, %v823
        %v825 = vsel %vm339, %v807, 0.0
        %v826 = vadd.f32 %v824, %v825
        %v827 = vsel %vm339, %v808, 0.0
        %v828 = vadd.f32 %v826, %v827
        %v829 = vsel %vm339, %v809, 0.0
        %v830 = vadd.f32 %v828, %v829
        %v831 = vsel %vm339, %v810, 0.0
        %v832 = vadd.f32 %v830, %v831
        %v833 = vsel %vm339, %v811, 0.0
        %v834 = vadd.f32 %v832, %v833
        %v835 = vsel %vm339, %v812, 0.0
        %v836 = vadd.f32 %v834, %v835
        %v837 = vsel %vm339, %v813, 0.0
        %v838 = vadd.f32 %v836, %v837
        %v839 = vsel %vm339, %v814, 0.0
        %v840 = vadd.f32 %v838, %v839
        %v841 = vsel %vm339, %v815, 0.0
        %v842 = vadd.f32 %v840, %v841
        %v843 = vsel %vm339, %v816, 0.0
        %v844 = vadd.f32 %v842, %v843
        %v845 = vsel %vm339, %v817, 0.0
        %v846 = vadd.f32 %v844, %v845
        %v847 = vsel %vm339, %v818, 0.0
        %v848 = vadd.f32 %v846, %v847
        %v849 = vsel %vm339, %v819, 0.0
        %v850 = vadd.f32 %v848, %v849
        %v851 = vrot.slane %v850, 4
        %v852 = vadd.f32 %v850, %v851
        %v853 = vrot.slane %v852, 2
        %v854 = vadd.f32 %v852, %v853
        %v855 = vrot.slane %v854, 1
        %v856 = vadd.f32 %v854, %v855
        %v857 = vadd.f32 %v803, %v856
        %858 = vst.msk [vmem:[#allocation3] sm:$0x1] %vm801, %v857
        %859 = vst.msk [vmem:[%s265] sm:$0xff] %vm339, %v689
        %860 = vst.msk [vmem:[%s265 + $0x8] sm:$0xff] %vm339, %v692
        %861 = vst.msk [vmem:[%s265 + $0x10] sm:$0xff] %vm339, %v697
        %862 = vst.msk [vmem:[%s265 + $0x18] sm:$0xff] %vm339, %v700
        %863 = vst.msk [vmem:[%s265 + $0x20] sm:$0xff] %vm339, %v705
        %864 = vst.msk [vmem:[%s265 + $0x28] sm:$0xff] %vm339, %v708
        %865 = vst.msk [vmem:[%s265 + $0x30] sm:$0xff] %vm339, %v713
        %866 = vst.msk [vmem:[%s265 + $0x38] sm:$0xff] %vm339, %v716
        %867 = vst.msk [vmem:[%s265 + $0x40] sm:$0xff] %vm339, %v721
        %868 = vst.msk [vmem:[%s265 + $0x48] sm:$0xff] %vm339, %v724
        %869 = vst.msk [vmem:[%s265 + $0x50] sm:$0xff] %vm339, %v729
        %870 = vst.msk [vmem:[%s265 + $0x58] sm:$0xff] %vm339, %v732
        %871 = vst.msk [vmem:[%s265 + $0x60] sm:$0xff] %vm339, %v737
        %872 = vst.msk [vmem:[%s265 + $0x68] sm:$0xff] %vm339, %v740
        %873 = vst.msk [vmem:[%s265 + $0x70] sm:$0xff] %vm339, %v745
        %874 = vst.msk [vmem:[%s265 + $0x78] sm:$0xff] %vm339, %v748
        // Predicated region
        $region53: #{tpu_custom_call.1} parent=47 // pred_check
          %p875 = pneg %p755
        $region54: #{tpu_custom_call.1} parent=47 // pred_check_branch
          %877 = sbr.rel (%p875) target = $region56
        $region55: #{tpu_custom_call.1} parent=47 // pred_region
          %v878 = vld [vmem:[#allocation2] sm:$0x1]
          %v879 = vrcp.pop 128.0
          %v880 = vmul.f32 %v878, %v879
          %v881 = vld [vmem:[#allocation3] sm:$0x1]
          %v882 = vmul.f32 %v881, %v879
          %v883 = vmul.f32 %v880, %v880
          %v884 = vsub.f32 %v882, %v883
          %v885 = vadd.f32 %v884, 1e-05
          %v886 = vrsqrt.pop %v885
          %v887 = vld [vmem:[%s4] sm:$0x1]
          %v888 = vmul.f32 %v887, %v886
          %889 = vst.msk [vmem:[#allocation4] sm:$0x1] %vm801, %v888
          %v890 = vld [vmem:[%s5] sm:$0x1]
          %v891 = vmul.f32 %v880, %v888
          %v892 = vsub.f32 %v890, %v891
          %893 = vst.msk [vmem:[#allocation5] sm:$0x1] %vm801, %v892
        $region56: #{tpu_custom_call.1} parent=47 // pred_fallthru
          _
      $region48: #{tpu_custom_call.1} parent=43 // pred_fallthru
        _
      %p894 = scmp.eq.s32.totalorder %s21, 1
      // Predicated region
      $region57: #{tpu_custom_call.1} parent=43 // pred_check
        %p895 = pneg %p894
      $region58: #{tpu_custom_call.1} parent=43 // pred_check_branch
        %897 = sbr.rel (%p895) target = $region60
      $region59: #{tpu_custom_call.1} parent=43 // pred_region
        %v898 = vld [vmem:[#allocation4] sm:$0x1]
        %v900 = vlaneseq
        %v901 = vshrl.u32 %v900, 7
        %v902 = vsub.s32 0, %v901
        %v903 = vrot.slane %v898, %v902
        %v905 = vmul.f32 %v689, %v903
        %v906 = vmul.f32 %v692, %v903
        %v907 = vmul.f32 %v697, %v903
        %v908 = vmul.f32 %v700, %v903
        %v909 = vmul.f32 %v705, %v903
        %v910 = vmul.f32 %v708, %v903
        %v911 = vmul.f32 %v713, %v903
        %v912 = vmul.f32 %v716, %v903
        %v913 = vmul.f32 %v721, %v903
        %v914 = vmul.f32 %v724, %v903
        %v915 = vmul.f32 %v729, %v903
        %v916 = vmul.f32 %v732, %v903
        %v917 = vmul.f32 %v737, %v903
        %v918 = vmul.f32 %v740, %v903
        %v919 = vmul.f32 %v745, %v903
        %v920 = vmul.f32 %v748, %v903
        %v921 = vld [vmem:[#allocation5] sm:$0x1]
        %v923 = vlaneseq
        %v924 = vshrl.u32 %v923, 7
        %v925 = vsub.s32 0, %v924
        %v926 = vrot.slane %v921, %v925
        %v928 = vadd.f32 %v905, %v926
        %v929 = vadd.f32 %v906, %v926
        %v930 = vadd.f32 %v907, %v926
        %v931 = vadd.f32 %v908, %v926
        %v932 = vadd.f32 %v909, %v926
        %v933 = vadd.f32 %v910, %v926
        %v934 = vadd.f32 %v911, %v926
        %v935 = vadd.f32 %v912, %v926
        %v936 = vadd.f32 %v913, %v926
        %v937 = vadd.f32 %v914, %v926
        %v938 = vadd.f32 %v915, %v926
        %v939 = vadd.f32 %v916, %v926
        %v940 = vadd.f32 %v917, %v926
        %v941 = vadd.f32 %v918, %v926
        %v942 = vadd.f32 %v919, %v926
        %v943 = vadd.f32 %v920, %v926
        %944 = vst.msk [vmem:[%s265] sm:$0xff] %vm339, %v928
        %945 = vst.msk [vmem:[%s265 + $0x8] sm:$0xff] %vm339, %v929
        %946 = vst.msk [vmem:[%s265 + $0x10] sm:$0xff] %vm339, %v930
        %947 = vst.msk [vmem:[%s265 + $0x18] sm:$0xff] %vm339, %v931
        %948 = vst.msk [vmem:[%s265 + $0x20] sm:$0xff] %vm339, %v932
        %949 = vst.msk [vmem:[%s265 + $0x28] sm:$0xff] %vm339, %v933
        %950 = vst.msk [vmem:[%s265 + $0x30] sm:$0xff] %vm339, %v934
        %951 = vst.msk [vmem:[%s265 + $0x38] sm:$0xff] %vm339, %v935
        %952 = vst.msk [vmem:[%s265 + $0x40] sm:$0xff] %vm339, %v936
        %953 = vst.msk [vmem:[%s265 + $0x48] sm:$0xff] %vm339, %v937
        %954 = vst.msk [vmem:[%s265 + $0x50] sm:$0xff] %vm339, %v938
        %955 = vst.msk [vmem:[%s265 + $0x58] sm:$0xff] %vm339, %v939
        %956 = vst.msk [vmem:[%s265 + $0x60] sm:$0xff] %vm339, %v940
        %957 = vst.msk [vmem:[%s265 + $0x68] sm:$0xff] %vm339, %v941
        %958 = vst.msk [vmem:[%s265 + $0x70] sm:$0xff] %vm339, %v942
        %959 = vst.msk [vmem:[%s265 + $0x78] sm:$0xff] %vm339, %v943
      $region60: #{tpu_custom_call.1} parent=43 // pred_fallthru
        _
      %s960 = smul.u32 16, %s22
      %p961 = scmp.lt.s32.totalorder %s960, 15
      %s962 = scalar_select %p961, %s960, 15
      %s963 = smul.addr %s962, 8
      %s964 = scalar_lea.vmem %s6, %s963
      // Predicated region
      $region61: #{tpu_custom_call.1} parent=43 // pred_check
        %p965 = pneg %p178
      $region62: #{tpu_custom_call.1} parent=43 // pred_check_branch
        %967 = sbr.rel (%p965) target = $region64
      $region63: #{tpu_custom_call.1} parent=43 // pred_region
        %s968 = smul.u32 16, %s22
      $region64: #{tpu_custom_call.1} parent=43 // pred_fallthru
        _
      // Predicated region
      $region65: #{tpu_custom_call.1} parent=43 // pred_check
        %p969 = pneg %p178
      $region66: #{tpu_custom_call.1} parent=43 // pred_check_branch
        %971 = sbr.rel (%p969) target = $region68
      $region67: #{tpu_custom_call.1} parent=43 // pred_region
        %s972 = smul.u32 16, %s22
        %p973 = scmp.lt.s32.totalorder %s972, 15
        %s974 = scalar_select %p973, %s972, 15
        %s975 = smul.addr %s974, 8
        %s976 = scalar_lea.vmem %s6, %s975
      $region68: #{tpu_custom_call.1} parent=43 // pred_fallthru
        _
    $region44: #{tpu_custom_call.1} parent=5 // pred_fallthru
      _
    %p977 = scmp.le.s32.totalorder 2, %s12
    // Predicated region
    $region69: #{tpu_custom_call.1} parent=5 // pred_check
      %p978 = pneg %p977
    $region70: #{tpu_custom_call.1} parent=5 // pred_check_branch
      %980 = sbr.rel (%p978) target = $region72
    $region71: #{tpu_custom_call.1} parent=5 // pred_region
      %s981 = ssub.s32 %s12, 2
    $region72: #{tpu_custom_call.1} parent=5 // pred_fallthru
      _
  $region6: #{tpu_custom_call.1} parent=0 // loop_footer
    %s16 = sadd.s32 1, %s12
  $region7: #{tpu_custom_call.1} parent=0 // loop_footer_branch
    %11 = sbr.rel target = $region3
  $region8: #{tpu_custom_call.1} parent=0 // loop_exit
    _

</llo_original>
